<compile_context>
chip_gen: v6e
topology: v6e:2x2x1
jax: 0.10.0
libtpu: 0.0.40
codegen_flags: <defaults>
</compile_context>

<pallas_src>
import functools

import jax
import jax.numpy as jnp
from jax.experimental import pallas as pl
from jax.experimental.pallas import tpu as pltpu


def _rank_mse_losses(qs_ref, qsv_ref, fs_ref, qconf_ref, *, margin, conf_thr,
                     mse_weight, rank_weight, if_conf):
    """Rank + MSE losses on lane-dense (1, B) batch vectors. Returns (1, 1)."""
    qs = qs_ref[...]          # (1, B)
    qsv = qsv_ref[...]        # (1, B)
    fs = fs_ref[...]          # (1, B) — already averaged over negatives
    qconf = qconf_ref[...]    # (1, B)

    inv_b = 1.0 / qs.shape[1]
    mse_loss = (mse_weight * inv_b) * jnp.sum(
        (qsv - qconf) ** 2, axis=1, keepdims=True)              # (1, 1)

    rank = jnp.maximum(margin - (qs - fs), 0.0)                 # relu, (1, B)
    if if_conf:
        rank = rank * jnp.where(qconf < conf_thr, 0.0, qconf)
    rank_loss = (rank_weight * inv_b) * jnp.sum(rank, axis=1, keepdims=True)
    return rank_loss + mse_loss                                 # (1, 1)


# --------------------------------------------------------------------------
# Path A: embedding-variance table small enough to live in VMEM (bulk DMA by
# Pallas), rows gathered with dynamic sublane slices.
# --------------------------------------------------------------------------
def _gmucp_kernel_vmem_table(ids_ref, wb_ref,                  # SMEM scalars
                             ics_ref,                          # (N, 1) VMEM
                             qs_ref, qsv_ref, fs_ref, qconf_ref,  # (1, B) VMEM
                             emb_ref,                          # (S, D) VMEM
                             o_ref,                            # (1, 1) out
                             *, margin, conf_thr, mse_weight, rank_weight,
                             ic_weight, if_conf, n_rows):
    w_coef = wb_ref[0]                                         # hoisted SMEM reads
    b_coef = wb_ref[1]

    acc = jnp.zeros((1, 1), jnp.float32)                       # register carry
    for s in range(n_rows):                                    # unrolled at trace time
        row_id = ids_ref[s]                                    # SMEM int32
        row = emb_ref[pl.ds(row_id, 1), :]                     # (1, D) dynamic slice
        norm = jnp.sqrt(jnp.sum(row * row, axis=-1, keepdims=True))   # (1, 1)
        err = w_coef * norm + b_coef - ics_ref[pl.ds(s, 1), :]         # (1, 1)
        acc = acc + err * err

    ic_loss = (ic_weight / n_rows) * acc                       # (1, 1)
    o_ref[...] = ic_loss + _rank_mse_losses(
        qs_ref, qsv_ref, fs_ref, qconf_ref, margin=margin, conf_thr=conf_thr,
        mse_weight=mse_weight, rank_weight=rank_weight, if_conf=if_conf)


# --------------------------------------------------------------------------
# Path B: table stays in HBM; rows gathered with double-buffered waves of G
# DMAs; vectorized per-wave norm/error reduction.
# --------------------------------------------------------------------------
def _gmucp_kernel_hbm_table(ids_ref, wb_ref,                   # SMEM scalars
                            ics_ref,                           # (N, 1) VMEM
                            qs_ref, qsv_ref, fs_ref, qconf_ref,  # (1, B) VMEM
                            emb_hbm,                           # raw HBM table
                            o_ref,                             # (1, 1) out
                            wave_buf, wave_sem,                # scratch
                            *, margin, conf_thr, mse_weight, rank_weight,
                            ic_weight, if_conf, n_rows, wave_size):
    G = wave_size
    n_waves = (n_rows + G - 1) // G
    w_coef = wb_ref[0]                                         # hoisted SMEM reads
    b_coef = wb_ref[1]

    def start_wave(widx, slot):
        """Issue DMAs for every valid row of wave `widx` into buffer `slot`."""
        base = widx * G
        copies = []
        for j in range(min(G, n_rows - base)):                 # static count
            row_id = ids_ref[base + j]                         # SMEM int32
            cp = pltpu.make_async_copy(
                emb_hbm.at[pl.ds(row_id, 1), :],               # (1, D) HBM slice
                wave_buf.at[slot, pl.ds(j, 1), :],             # (1, D) VMEM row
                wave_sem.at[slot, j])
            cp.start()
            copies.append(cp)
        return copies

    acc = jnp.zeros((1, 1), jnp.float32)                       # register carry
    pending = start_wave(0, 0)                                 # prime pipeline
    for widx in range(n_waves):                                # unrolled
        slot = widx & 1
        base = widx * G
        g = min(G, n_rows - base)

        # Vector/scalar reads & next-wave DMA starts before the waits.
        ic_vec = ics_ref[pl.ds(base, g), :]                    # (g, 1)
        nxt = start_wave(widx + 1, 1 - slot) if widx + 1 < n_waves else None

        for cp in pending:                                     # wait current wave
            cp.wait()
        pending = nxt

        rows = wave_buf[slot]                                  # (G, D)
        norms = jnp.sqrt(jnp.sum(rows * rows, axis=-1, keepdims=True))  # (G, 1)
        errs = w_coef * norms[:g, :] + b_coef - ic_vec                  # (g, 1)
        acc = acc + jnp.sum(errs * errs, axis=0, keepdims=True)

    ic_loss = (ic_weight / n_rows) * acc                       # (1, 1)
    o_ref[...] = ic_loss + _rank_mse_losses(
        qs_ref, qsv_ref, fs_ref, qconf_ref, margin=margin, conf_thr=conf_thr,
        mse_weight=mse_weight, rank_weight=rank_weight, if_conf=if_conf)


# --------------------------------------------------------------------------
# Wrapper
# --------------------------------------------------------------------------
def gmucp_loss(query_scores, query_scores_var, false_scores, query_confidence,
               symbolid_ic, symbol_emb_var, ic_loss_w, ic_loss_b, *,
               num_neg, margin, conf_thr, mse_weight, rank_weight, ic_weight,
               if_conf, vmem_table_limit_bytes=12 * 1024 * 1024, gather_wave=8):
    B = query_scores.shape[0]
    N = symbolid_ic.shape[0]
    S, D = symbol_emb_var.shape
    if N == 0:
        raise ValueError("symbolid_ic must contain at least one row")

    # Lane-dense layouts: B on the 128-lane axis.
    qs = query_scores.reshape(1, B).astype(jnp.float32)
    qsv = query_scores_var.reshape(1, B).astype(jnp.float32)
    qconf = query_confidence.reshape(1, B).astype(jnp.float32)
    # Pre-reduce negatives outside the kernel (XLA fuses this tiny mean).
    fs_mean = jnp.mean(
        false_scores.reshape(B, num_neg).astype(jnp.float32),
        axis=1).reshape(1, B)

    # Symbol ids as exact int32 SMEM scalars; ic targets as a (N,1) VMEM vector.
    ids = symbolid_ic[:, 0].astype(jnp.int32)                       # (N,)
    ics = symbolid_ic[:, 1].astype(jnp.float32).reshape(N, 1)       # (N, 1)
    wb = jnp.array([ic_loss_w, ic_loss_b], dtype=jnp.float32)       # (2,)

    emb = symbol_emb_var.astype(jnp.float32)

    smem_spec = pl.BlockSpec(memory_space=pltpu.MemorySpace.SMEM)
    vmem_spec = pl.BlockSpec(memory_space=pltpu.MemorySpace.VMEM)

    common = dict(margin=float(margin), conf_thr=float(conf_thr),
                  mse_weight=float(mse_weight), rank_weight=float(rank_weight),
                  ic_weight=float(ic_weight), if_conf=bool(if_conf),
                  n_rows=int(N))

    # Padded VMEM footprint of the table ((8,128) tiling, f32).
    table_vmem_bytes = (-(-S // 8) * 8) * (-(-D // 128) * 128) * 4

    if table_vmem_bytes <= int(vmem_table_limit_bytes):
        # ---- Path A: whole table VMEM-resident (one bulk DMA). -------------
        kernel = functools.partial(_gmucp_kernel_vmem_table, **common)
        vmem_limit = max(16 * 1024 * 1024,
                         2 * table_vmem_bytes + 6 * 1024 * 1024)
        out = pl.pallas_call(
            kernel,
            out_shape=jax.ShapeDtypeStruct((1, 1), jnp.float32),
            in_specs=[smem_spec,   # ids (int32)
                      smem_spec,   # [w, b]
                      vmem_spec,   # ics   (N, 1)
                      vmem_spec,   # qs    (1, B)
                      vmem_spec,   # qsv   (1, B)
                      vmem_spec,   # fs    (1, B)
                      vmem_spec,   # qconf (1, B)
                      vmem_spec],  # emb table (S, D) — bulk DMA'd to VMEM
            out_specs=vmem_spec,
            compiler_params=pltpu.CompilerParams(vmem_limit_bytes=vmem_limit),
        )(ids, wb, ics, qs, qsv, fs_mean, qconf, emb)
    else:
        # ---- Path B: table stays in HBM; wave-batched row gather. ----------
        G = max(1, int(gather_wave))
        kernel = functools.partial(_gmucp_kernel_hbm_table, wave_size=G,
                                   **common)
        out = pl.pallas_call(
            kernel,
            out_shape=jax.ShapeDtypeStruct((1, 1), jnp.float32),
            in_specs=[smem_spec,   # ids (int32)
                      smem_spec,   # [w, b]
                      vmem_spec,   # ics   (N, 1)
                      vmem_spec,   # qs    (1, B)
                      vmem_spec,   # qsv   (1, B)
                      vmem_spec,   # fs    (1, B)
                      vmem_spec,   # qconf (1, B)
                      pl.BlockSpec(memory_space=pl.ANY)],  # emb table in HBM
            out_specs=vmem_spec,
            scratch_shapes=[
                pltpu.VMEM((2, G, D), jnp.float32),   # double-buffered wave
                pltpu.SemaphoreType.DMA((2, G)),      # one sem per (slot, row)
            ],
            compiler_params=pltpu.CompilerParams(
                vmem_limit_bytes=16 * 1024 * 1024),
        )(ids, wb, ics, qs, qsv, fs_mean, qconf, emb)
    return out[0, 0]


def gmucp_loss_ref(query_scores, query_scores_var, false_scores, query_confidence,
                   symbolid_ic, symbol_emb_var, ic_loss_w, ic_loss_b, *,
                   num_neg, margin, conf_thr, mse_weight, rank_weight, ic_weight,
                   if_conf):
    """Pure-JAX reference mirroring the PyTorch forward."""
    B = query_scores.shape[0]
    fs = false_scores
    if num_neg != 1:
        fs = jnp.mean(fs.reshape(B, num_neg), axis=1).reshape(B)
    conf_mask = jnp.where(query_confidence < conf_thr,
                          jnp.zeros_like(query_confidence), query_confidence)
    mse_loss = mse_weight * jnp.mean((query_scores_var - query_confidence) ** 2)
    rank = jax.nn.relu(margin - (query_scores - fs))
    rank_loss = jnp.mean(rank * conf_mask) if if_conf else jnp.mean(rank)
    rank_loss = rank_weight * rank_loss
    ids = symbolid_ic[:, 0].astype(jnp.int32)
    ics = symbolid_ic[:, 1]
    emb = symbol_emb_var[ids]
    norm = jnp.linalg.norm(emb, axis=1)
    ic_loss = ic_weight * jnp.mean(jnp.square(ic_loss_w * norm + ic_loss_b - ics))
    return rank_loss + mse_loss + ic_loss


if __name__ == "__main__":
    # static hyper-parameters of GMUCp_Loss
    num_neg = 4
    margin = 5.0
    conf_thr = 0.3
    mse_weight = 1.0
    rank_weight = 1.0
    ic_weight = 0.1
    if_conf = True

    B = 8            # number of queries
    N = 8            # rows in symbolid_ic
    num_symbols = 64
    emb_dim = 32

    key = jax.random.PRNGKey(0)
    k = jax.random.split(key, 8)

    query_scores = jax.random.normal(k[0], (B,), dtype=jnp.float32)
    query_scores_var = jax.random.uniform(k[1], (B,), dtype=jnp.float32)
    false_scores = jax.random.normal(k[2], (B * num_neg,), dtype=jnp.float32)
    query_confidence = jax.random.uniform(k[3], (B,), dtype=jnp.float32)
    sym_ids = jax.random.randint(k[4], (N,), 0, num_symbols).astype(jnp.float32)
    sym_ics = jax.random.uniform(k[5], (N,), dtype=jnp.float32)
    symbolid_ic = jnp.stack([sym_ids, sym_ics], axis=1)  # (N, 2)

    # deterministic "model" parameters (synthetic init, not a checkpoint)
    symbol_emb_var = 0.1 * jax.random.normal(k[6], (num_symbols, emb_dim),
                                             dtype=jnp.float32)
    ic_loss_w = 1.0
    ic_loss_b = 0.0

    args = (query_scores, query_scores_var, false_scores, query_confidence,
            symbolid_ic, symbol_emb_var, ic_loss_w, ic_loss_b)
    kwargs = dict(num_neg=num_neg, margin=margin, conf_thr=conf_thr,
                  mse_weight=mse_weight, rank_weight=rank_weight,
                  ic_weight=ic_weight, if_conf=if_conf)

    ref = gmucp_loss_ref(*args, **kwargs)

    # Path A: small table -> VMEM-resident bulk copy (the common case here).
    loss_a = jax.block_until_ready(gmucp_loss(*args, **kwargs))
    assert jnp.allclose(loss_a, ref, atol=1e-5, rtol=1e-5), (loss_a, ref)

    # Path B: force the HBM-table wave-gather fallback (wave size 3 exercises
    # a partial final wave) and check it too.
    loss_b = jax.block_until_ready(
        gmucp_loss(*args, vmem_table_limit_bytes=0, gather_wave=3, **kwargs))
    assert jnp.allclose(loss_b, ref, atol=1e-5, rtol=1e-5), (loss_b, ref)

    print("KERNEL_OK")
</pallas_src>

<mosaic_0001>
module attributes {stable_mosaic.version = 11 : i64} {
  func.func @_gmucp_kernel_vmem_table(%arg0: memref<8xi32, #tpu.memory_space<smem>>, %arg1: memref<2xf32, #tpu.memory_space<smem>>, %arg2: memref<8x1xf32, #tpu.memory_space<vmem>>, %arg3: memref<1x8xf32, #tpu.memory_space<vmem>>, %arg4: memref<1x8xf32, #tpu.memory_space<vmem>>, %arg5: memref<1x8xf32, #tpu.memory_space<vmem>>, %arg6: memref<1x8xf32, #tpu.memory_space<vmem>>, %arg7: memref<64x32xf32, #tpu.memory_space<vmem>>, %arg8: memref<1x1xf32, #tpu.memory_space<vmem>>) attributes {dimension_semantics = [], scalar_prefetch = 0 : i64, scratch_operands = 0 : i64, tpu.core_type = #tpu.core_type<tc>} {
    %c0 = arith.constant 0 : index
    %0 = memref.load %arg1[%c0] : memref<2xf32, #tpu.memory_space<smem>>
    %c1 = arith.constant 1 : index
    %1 = memref.load %arg1[%c1] : memref<2xf32, #tpu.memory_space<smem>>
    %cst = arith.constant 0.000000e+00 : f32
    %2 = vector.broadcast %cst : f32 to vector<1x1xf32>
    %c0_0 = arith.constant 0 : index
    %3 = memref.load %arg0[%c0_0] : memref<8xi32, #tpu.memory_space<smem>>
    %4 = arith.index_cast %3 : i32 to index
    %c0_1 = arith.constant 0 : index
    %5 = vector.load %arg7[%4, %c0_1] : memref<64x32xf32, #tpu.memory_space<vmem>>, vector<1x32xf32>
    %6 = arith.mulf %5, %5 : vector<1x32xf32>
    %cst_2 = arith.constant dense<0.000000e+00> : vector<1xf32>
    %7 = vector.multi_reduction <add>, %6, %cst_2 [1] : vector<1x32xf32> to vector<1xf32>
    %8 = vector.shape_cast %7 : vector<1xf32> to vector<1x1xf32>
    %9 = math.sqrt %8 : vector<1x1xf32>
    %10 = vector.broadcast %0 : f32 to vector<1x1xf32>
    %11 = arith.mulf %10, %9 : vector<1x1xf32>
    %12 = vector.broadcast %1 : f32 to vector<1x1xf32>
    %13 = arith.addf %11, %12 : vector<1x1xf32>
    %c0_3 = arith.constant 0 : index
    %c0_4 = arith.constant 0 : index
    %14 = vector.load %arg2[%c0_3, %c0_4] : memref<8x1xf32, #tpu.memory_space<vmem>>, vector<1x1xf32>
    %15 = arith.subf %13, %14 : vector<1x1xf32>
    %16 = arith.mulf %15, %15 : vector<1x1xf32>
    %17 = arith.addf %2, %16 : vector<1x1xf32>
    %c1_5 = arith.constant 1 : index
    %18 = memref.load %arg0[%c1_5] : memref<8xi32, #tpu.memory_space<smem>>
    %19 = arith.index_cast %18 : i32 to index
    %c0_6 = arith.constant 0 : index
    %20 = vector.load %arg7[%19, %c0_6] : memref<64x32xf32, #tpu.memory_space<vmem>>, vector<1x32xf32>
    %21 = arith.mulf %20, %20 : vector<1x32xf32>
    %cst_7 = arith.constant dense<0.000000e+00> : vector<1xf32>
    %22 = vector.multi_reduction <add>, %21, %cst_7 [1] : vector<1x32xf32> to vector<1xf32>
    %23 = vector.shape_cast %22 : vector<1xf32> to vector<1x1xf32>
    %24 = math.sqrt %23 : vector<1x1xf32>
    %25 = vector.broadcast %0 : f32 to vector<1x1xf32>
    %26 = arith.mulf %25, %24 : vector<1x1xf32>
    %27 = vector.broadcast %1 : f32 to vector<1x1xf32>
    %28 = arith.addf %26, %27 : vector<1x1xf32>
    %c1_8 = arith.constant 1 : index
    %c0_9 = arith.constant 0 : index
    %29 = vector.load %arg2[%c1_8, %c0_9] : memref<8x1xf32, #tpu.memory_space<vmem>>, vector<1x1xf32>
    %30 = arith.subf %28, %29 : vector<1x1xf32>
    %31 = arith.mulf %30, %30 : vector<1x1xf32>
    %32 = arith.addf %17, %31 : vector<1x1xf32>
    %c2 = arith.constant 2 : index
    %33 = memref.load %arg0[%c2] : memref<8xi32, #tpu.memory_space<smem>>
    %34 = arith.index_cast %33 : i32 to index
    %c0_10 = arith.constant 0 : index
    %35 = vector.load %arg7[%34, %c0_10] : memref<64x32xf32, #tpu.memory_space<vmem>>, vector<1x32xf32>
    %36 = arith.mulf %35, %35 : vector<1x32xf32>
    %cst_11 = arith.constant dense<0.000000e+00> : vector<1xf32>
    %37 = vector.multi_reduction <add>, %36, %cst_11 [1] : vector<1x32xf32> to vector<1xf32>
    %38 = vector.shape_cast %37 : vector<1xf32> to vector<1x1xf32>
    %39 = math.sqrt %38 : vector<1x1xf32>
    %40 = vector.broadcast %0 : f32 to vector<1x1xf32>
    %41 = arith.mulf %40, %39 : vector<1x1xf32>
    %42 = vector.broadcast %1 : f32 to vector<1x1xf32>
    %43 = arith.addf %41, %42 : vector<1x1xf32>
    %c2_12 = arith.constant 2 : index
    %c0_13 = arith.constant 0 : index
    %44 = vector.load %arg2[%c2_12, %c0_13] : memref<8x1xf32, #tpu.memory_space<vmem>>, vector<1x1xf32>
    %45 = arith.subf %43, %44 : vector<1x1xf32>
    %46 = arith.mulf %45, %45 : vector<1x1xf32>
    %47 = arith.addf %32, %46 : vector<1x1xf32>
    %c3 = arith.constant 3 : index
    %48 = memref.load %arg0[%c3] : memref<8xi32, #tpu.memory_space<smem>>
    %49 = arith.index_cast %48 : i32 to index
    %c0_14 = arith.constant 0 : index
    %50 = vector.load %arg7[%49, %c0_14] : memref<64x32xf32, #tpu.memory_space<vmem>>, vector<1x32xf32>
    %51 = arith.mulf %50, %50 : vector<1x32xf32>
    %cst_15 = arith.constant dense<0.000000e+00> : vector<1xf32>
    %52 = vector.multi_reduction <add>, %51, %cst_15 [1] : vector<1x32xf32> to vector<1xf32>
    %53 = vector.shape_cast %52 : vector<1xf32> to vector<1x1xf32>
    %54 = math.sqrt %53 : vector<1x1xf32>
    %55 = vector.broadcast %0 : f32 to vector<1x1xf32>
    %56 = arith.mulf %55, %54 : vector<1x1xf32>
    %57 = vector.broadcast %1 : f32 to vector<1x1xf32>
    %58 = arith.addf %56, %57 : vector<1x1xf32>
    %c3_16 = arith.constant 3 : index
    %c0_17 = arith.constant 0 : index
    %59 = vector.load %arg2[%c3_16, %c0_17] : memref<8x1xf32, #tpu.memory_space<vmem>>, vector<1x1xf32>
    %60 = arith.subf %58, %59 : vector<1x1xf32>
    %61 = arith.mulf %60, %60 : vector<1x1xf32>
    %62 = arith.addf %47, %61 : vector<1x1xf32>
    %c4 = arith.constant 4 : index
    %63 = memref.load %arg0[%c4] : memref<8xi32, #tpu.memory_space<smem>>
    %64 = arith.index_cast %63 : i32 to index
    %c0_18 = arith.constant 0 : index
    %65 = vector.load %arg7[%64, %c0_18] : memref<64x32xf32, #tpu.memory_space<vmem>>, vector<1x32xf32>
    %66 = arith.mulf %65, %65 : vector<1x32xf32>
    %cst_19 = arith.constant dense<0.000000e+00> : vector<1xf32>
    %67 = vector.multi_reduction <add>, %66, %cst_19 [1] : vector<1x32xf32> to vector<1xf32>
    %68 = vector.shape_cast %67 : vector<1xf32> to vector<1x1xf32>
    %69 = math.sqrt %68 : vector<1x1xf32>
    %70 = vector.broadcast %0 : f32 to vector<1x1xf32>
    %71 = arith.mulf %70, %69 : vector<1x1xf32>
    %72 = vector.broadcast %1 : f32 to vector<1x1xf32>
    %73 = arith.addf %71, %72 : vector<1x1xf32>
    %c4_20 = arith.constant 4 : index
    %c0_21 = arith.constant 0 : index
    %74 = vector.load %arg2[%c4_20, %c0_21] : memref<8x1xf32, #tpu.memory_space<vmem>>, vector<1x1xf32>
    %75 = arith.subf %73, %74 : vector<1x1xf32>
    %76 = arith.mulf %75, %75 : vector<1x1xf32>
    %77 = arith.addf %62, %76 : vector<1x1xf32>
    %c5 = arith.constant 5 : index
    %78 = memref.load %arg0[%c5] : memref<8xi32, #tpu.memory_space<smem>>
    %79 = arith.index_cast %78 : i32 to index
    %c0_22 = arith.constant 0 : index
    %80 = vector.load %arg7[%79, %c0_22] : memref<64x32xf32, #tpu.memory_space<vmem>>, vector<1x32xf32>
    %81 = arith.mulf %80, %80 : vector<1x32xf32>
    %cst_23 = arith.constant dense<0.000000e+00> : vector<1xf32>
    %82 = vector.multi_reduction <add>, %81, %cst_23 [1] : vector<1x32xf32> to vector<1xf32>
    %83 = vector.shape_cast %82 : vector<1xf32> to vector<1x1xf32>
    %84 = math.sqrt %83 : vector<1x1xf32>
    %85 = vector.broadcast %0 : f32 to vector<1x1xf32>
    %86 = arith.mulf %85, %84 : vector<1x1xf32>
    %87 = vector.broadcast %1 : f32 to vector<1x1xf32>
    %88 = arith.addf %86, %87 : vector<1x1xf32>
    %c5_24 = arith.constant 5 : index
    %c0_25 = arith.constant 0 : index
    %89 = vector.load %arg2[%c5_24, %c0_25] : memref<8x1xf32, #tpu.memory_space<vmem>>, vector<1x1xf32>
    %90 = arith.subf %88, %89 : vector<1x1xf32>
    %91 = arith.mulf %90, %90 : vector<1x1xf32>
    %92 = arith.addf %77, %91 : vector<1x1xf32>
    %c6 = arith.constant 6 : index
    %93 = memref.load %arg0[%c6] : memref<8xi32, #tpu.memory_space<smem>>
    %94 = arith.index_cast %93 : i32 to index
    %c0_26 = arith.constant 0 : index
    %95 = vector.load %arg7[%94, %c0_26] : memref<64x32xf32, #tpu.memory_space<vmem>>, vector<1x32xf32>
    %96 = arith.mulf %95, %95 : vector<1x32xf32>
    %cst_27 = arith.constant dense<0.000000e+00> : vector<1xf32>
    %97 = vector.multi_reduction <add>, %96, %cst_27 [1] : vector<1x32xf32> to vector<1xf32>
    %98 = vector.shape_cast %97 : vector<1xf32> to vector<1x1xf32>
    %99 = math.sqrt %98 : vector<1x1xf32>
    %100 = vector.broadcast %0 : f32 to vector<1x1xf32>
    %101 = arith.mulf %100, %99 : vector<1x1xf32>
    %102 = vector.broadcast %1 : f32 to vector<1x1xf32>
    %103 = arith.addf %101, %102 : vector<1x1xf32>
    %c6_28 = arith.constant 6 : index
    %c0_29 = arith.constant 0 : index
    %104 = vector.load %arg2[%c6_28, %c0_29] : memref<8x1xf32, #tpu.memory_space<vmem>>, vector<1x1xf32>
    %105 = arith.subf %103, %104 : vector<1x1xf32>
    %106 = arith.mulf %105, %105 : vector<1x1xf32>
    %107 = arith.addf %92, %106 : vector<1x1xf32>
    %c7 = arith.constant 7 : index
    %108 = memref.load %arg0[%c7] : memref<8xi32, #tpu.memory_space<smem>>
    %109 = arith.index_cast %108 : i32 to index
    %c0_30 = arith.constant 0 : index
    %110 = vector.load %arg7[%109, %c0_30] : memref<64x32xf32, #tpu.memory_space<vmem>>, vector<1x32xf32>
    %111 = arith.mulf %110, %110 : vector<1x32xf32>
    %cst_31 = arith.constant dense<0.000000e+00> : vector<1xf32>
    %112 = vector.multi_reduction <add>, %111, %cst_31 [1] : vector<1x32xf32> to vector<1xf32>
    %113 = vector.shape_cast %112 : vector<1xf32> to vector<1x1xf32>
    %114 = math.sqrt %113 : vector<1x1xf32>
    %115 = vector.broadcast %0 : f32 to vector<1x1xf32>
    %116 = arith.mulf %115, %114 : vector<1x1xf32>
    %117 = vector.broadcast %1 : f32 to vector<1x1xf32>
    %118 = arith.addf %116, %117 : vector<1x1xf32>
    %c7_32 = arith.constant 7 : index
    %c0_33 = arith.constant 0 : index
    %119 = vector.load %arg2[%c7_32, %c0_33] : memref<8x1xf32, #tpu.memory_space<vmem>>, vector<1x1xf32>
    %120 = arith.subf %118, %119 : vector<1x1xf32>
    %121 = arith.mulf %120, %120 : vector<1x1xf32>
    %122 = arith.addf %107, %121 : vector<1x1xf32>
    %cst_34 = arith.constant 1.250000e-02 : f32
    %123 = vector.broadcast %cst_34 : f32 to vector<1x1xf32>
    %124 = arith.mulf %123, %122 : vector<1x1xf32>
    %c0_35 = arith.constant 0 : index
    %c0_36 = arith.constant 0 : index
    %125 = vector.load %arg3[%c0_35, %c0_36] : memref<1x8xf32, #tpu.memory_space<vmem>>, vector<1x8xf32>
    %c0_37 = arith.constant 0 : index
    %c0_38 = arith.constant 0 : index
    %126 = vector.load %arg4[%c0_37, %c0_38] : memref<1x8xf32, #tpu.memory_space<vmem>>, vector<1x8xf32>
    %c0_39 = arith.constant 0 : index
    %c0_40 = arith.constant 0 : index
    %127 = vector.load %arg5[%c0_39, %c0_40] : memref<1x8xf32, #tpu.memory_space<vmem>>, vector<1x8xf32>
    %c0_41 = arith.constant 0 : index
    %c0_42 = arith.constant 0 : index
    %128 = vector.load %arg6[%c0_41, %c0_42] : memref<1x8xf32, #tpu.memory_space<vmem>>, vector<1x8xf32>
    %129 = arith.subf %126, %128 : vector<1x8xf32>
    %130 = arith.mulf %129, %129 : vector<1x8xf32>
    %cst_43 = arith.constant dense<0.000000e+00> : vector<1xf32>
    %131 = vector.multi_reduction <add>, %130, %cst_43 [1] : vector<1x8xf32> to vector<1xf32>
    %132 = vector.shape_cast %131 : vector<1xf32> to vector<1x1xf32>
    %cst_44 = arith.constant 1.250000e-01 : f32
    %133 = vector.broadcast %cst_44 : f32 to vector<1x1xf32>
    %134 = arith.mulf %133, %132 : vector<1x1xf32>
    %135 = arith.subf %125, %127 : vector<1x8xf32>
    %cst_45 = arith.constant 5.000000e+00 : f32
    %136 = vector.broadcast %cst_45 : f32 to vector<1x8xf32>
    %137 = arith.subf %136, %135 : vector<1x8xf32>
    %cst_46 = arith.constant 0.000000e+00 : f32
    %138 = vector.broadcast %cst_46 : f32 to vector<1x8xf32>
    %139 = arith.maximumf %137, %138 : vector<1x8xf32>
    %cst_47 = arith.constant 3.000000e-01 : f32
    %140 = vector.broadcast %cst_47 : f32 to vector<1x8xf32>
    %141 = arith.cmpf olt, %128, %140 : vector<1x8xf32>
    %cst_48 = arith.constant 0.000000e+00 : f32
    %142 = vector.broadcast %cst_48 : f32 to vector<1x8xf32>
    %143 = arith.select %141, %142, %128 : vector<1x8xi1>, vector<1x8xf32>
    %144 = arith.mulf %139, %143 : vector<1x8xf32>
    %cst_49 = arith.constant dense<0.000000e+00> : vector<1xf32>
    %145 = vector.multi_reduction <add>, %144, %cst_49 [1] : vector<1x8xf32> to vector<1xf32>
    %146 = vector.shape_cast %145 : vector<1xf32> to vector<1x1xf32>
    %cst_50 = arith.constant 1.250000e-01 : f32
    %147 = vector.broadcast %cst_50 : f32 to vector<1x1xf32>
    %148 = arith.mulf %147, %146 : vector<1x1xf32>
    %149 = arith.addf %148, %134 : vector<1x1xf32>
    %150 = arith.addf %124, %149 : vector<1x1xf32>
    %c0_51 = arith.constant 0 : index
    %c0_52 = arith.constant 0 : index
    %151 = vector.load %arg8[%c0_51, %c0_52] : memref<1x1xf32, #tpu.memory_space<vmem>>, vector<1x1xf32>
    tpu.vector_store %arg8[%c0_51, %c0_52], %150 {strides = array<i32>} : memref<1x1xf32, #tpu.memory_space<vmem>>, vector<1x1xf32>,
    return
  }
}

</mosaic_0001>

<llo_original>
// kernel: tpu_custom_call.1
$region0: #{tpu_custom_call.1}
  #allocation0 [shape = 'u32[]', space=smem, size = 0x4, offset = 0x4, fixed_abs, tag = 'smem constant byte address 0x4 - core index']
  #allocation1 [shape = 'u32[144,128]{1,0:T(1,128)}', space=vmem, size = 0x12000, scoped, tag = 'internal scratch']
  %s0 = inlined_call_operand.vmem [shape: s32[8], index: 0, kind: input, shape index: {}]
  %s1 = inlined_call_operand.vmem [shape: f32[2], index: 1, kind: input, shape index: {}]
  %s2 = inlined_call_operand.vmem [shape: f32[8,1], index: 2, kind: input, shape index: {}]
  %s3 = inlined_call_operand.vmem [shape: f32[1,8], index: 3, kind: input, shape index: {}]
  %s4 = inlined_call_operand.vmem [shape: f32[1,8], index: 4, kind: input, shape index: {}]
  %s5 = inlined_call_operand.vmem [shape: f32[1,8], index: 5, kind: input, shape index: {}]
  %s6 = inlined_call_operand.vmem [shape: f32[1,8], index: 6, kind: input, shape index: {}]
  %s7 = inlined_call_operand.vmem [shape: f32[64,32], index: 7, kind: input, shape index: {}]
  %s8 = inlined_call_operand.hbm [shape: f32[1,1], index: 8, kind: output, shape index: {}]
  %s9 = sld [smem:[#allocation0]]
  $region50: #{tpu_custom_call.1} parent=0
    _
  %s11 = ssub.s32 1, %s9
  %s12 = scalar_select 0, %s11, %s9
  $region1: #{tpu_custom_call.1} parent=0
    #allocation2 [shape = 'u8[512]{0}', space=smem, size = 0x200, scoped, tag = 'input window, operand 0, single buffered']
    #allocation3 [shape = 's32[1]{0}', space=sflag, size = 0x4, scoped, tag = 'scoped memory for tpu_custom_call.1']
    #allocation4 [shape = 's32[1]{0}', space=sflag, size = 0x4, scoped, tag = 'scoped memory for tpu_custom_call.1']
    #allocation5 [shape = 'u8[512]{0}', space=smem, size = 0x200, scoped, tag = 'input window, operand 1, single buffered']
    #allocation6 [shape = 's32[1]{0}', space=sflag, size = 0x4, scoped, tag = 'scoped memory for tpu_custom_call.1']
    #allocation7 [shape = 'u8[512]{0}', space=vmem, size = 0x400, scoped, tag = 'output window, operand 0, single buffered']
    %13 = vsyncpa [#allocation4], 0
    %14 = vsyncpa [#allocation6], 0
    %15 = vsyncpa [#allocation3], 0
    // Predicated region
    $region2: #{tpu_custom_call.1} parent=1 // pred_check
      _
    $region3: #{tpu_custom_call.1} parent=1 // pred_check_branch
      %17 = sbr.rel (0) target = $region5
    $region4: #{tpu_custom_call.1} parent=1 // pred_region
      %s19 = ssub.s32 16, 16
      %20 = vsyncadd [#allocation4], %s19
      %s22 = sshll.u32 %s0, 4
      %s23 = int_to_ptr.vmem [resolvable:$true] %s22
      %25 = dma.vmem_to_smem %s23, 16, [#allocation2], [#allocation4]
    $region5: #{tpu_custom_call.1} parent=1 // pred_fallthru
      _
    // Predicated region
    $region6: #{tpu_custom_call.1} parent=1 // pred_check
      _
    $region7: #{tpu_custom_call.1} parent=1 // pred_check_branch
      %27 = sbr.rel (0) target = $region9
    $region8: #{tpu_custom_call.1} parent=1 // pred_region
      %s29 = ssub.s32 16, 16
      %30 = vsyncadd [#allocation6], %s29
      %s32 = sshll.u32 %s1, 4
      %s33 = int_to_ptr.vmem [resolvable:$true] %s32
      %35 = dma.vmem_to_smem %s33, 16, [#allocation5], [#allocation6]
    $region9: #{tpu_custom_call.1} parent=1 // pred_fallthru
      _
    // Predicated region
    $region10: #{tpu_custom_call.1} parent=1 // pred_check
      _
    $region11: #{tpu_custom_call.1} parent=1 // pred_check_branch
      %37 = sbr.rel (0) target = $region13
    $region12: #{tpu_custom_call.1} parent=1 // pred_region
      _
    $region13: #{tpu_custom_call.1} parent=1 // pred_fallthru
      _
    // Predicated region
    $region14: #{tpu_custom_call.1} parent=1 // pred_check
      _
    $region15: #{tpu_custom_call.1} parent=1 // pred_check_branch
      %39 = sbr.rel (0) target = $region17
    $region16: #{tpu_custom_call.1} parent=1 // pred_region
      _
    $region17: #{tpu_custom_call.1} parent=1 // pred_fallthru
      _
    // Predicated region
    $region18: #{tpu_custom_call.1} parent=1 // pred_check
      _
    $region19: #{tpu_custom_call.1} parent=1 // pred_check_branch
      %41 = sbr.rel (0) target = $region21
    $region20: #{tpu_custom_call.1} parent=1 // pred_region
      _
    $region21: #{tpu_custom_call.1} parent=1 // pred_fallthru
      _
    // Predicated region
    $region22: #{tpu_custom_call.1} parent=1 // pred_check
      _
    $region23: #{tpu_custom_call.1} parent=1 // pred_check_branch
      %43 = sbr.rel (0) target = $region25
    $region24: #{tpu_custom_call.1} parent=1 // pred_region
      _
    $region25: #{tpu_custom_call.1} parent=1 // pred_fallthru
      _
    // Predicated region
    $region26: #{tpu_custom_call.1} parent=1 // pred_check
      _
    $region27: #{tpu_custom_call.1} parent=1 // pred_check_branch
      %45 = sbr.rel (0) target = $region29
    $region28: #{tpu_custom_call.1} parent=1 // pred_region
      _
    $region29: #{tpu_custom_call.1} parent=1 // pred_fallthru
      _
    // Predicated region
    $region30: #{tpu_custom_call.1} parent=1 // pred_check
      _
    $region31: #{tpu_custom_call.1} parent=1 // pred_check_branch
      %47 = sbr.rel (0) target = $region33
    $region32: #{tpu_custom_call.1} parent=1 // pred_region
      _
    $region33: #{tpu_custom_call.1} parent=1 // pred_fallthru
      _
    // Predicated region
    $region34: #{tpu_custom_call.1} parent=1 // pred_check
      _
    $region35: #{tpu_custom_call.1} parent=1 // pred_check_branch
      %49 = sbr.rel (0) target = $region37
    $region36: #{tpu_custom_call.1} parent=1 // pred_region
      %50 = dma.done [#allocation4], 16
    $region37: #{tpu_custom_call.1} parent=1 // pred_fallthru
      _
    // Predicated region
    $region38: #{tpu_custom_call.1} parent=1 // pred_check
      _
    $region39: #{tpu_custom_call.1} parent=1 // pred_check_branch
      %52 = sbr.rel (0) target = $region41
    $region40: #{tpu_custom_call.1} parent=1 // pred_region
      %53 = dma.done [#allocation6], 16
    $region41: #{tpu_custom_call.1} parent=1 // pred_fallthru
      _
    %54 = sfence
    %s55 = sld [smem:[#allocation5]]
    %s56 = sld [smem:[#allocation5 + $0x1]]
    %s57 = sld [smem:[#allocation2]]
    %s58 = scalar_lea.vmem %s7, %s57
    %v59 = vld [vmem:[%s58] sm:$0x1]
    %v60 = vmul.f32 %v59, %v59
    %vm61 = vcmask 253952
    %v62 = vsel %vm61, %v60, 0.0
    %63 = vadd.xlane.f32.xlu0 %v62
    %v64 = vpop.xlane.xlu0 %63
    %v65 = vrsqrt.pop %v64
    %v66 = vmul.f32 %v64, %v65
    %vm67 = vcmp.eq.f32.partialorder %v64, inf
    %v68 = vsel %vm67, %v64, %v66
    %vm69 = vcmp.eq.f32.partialorder %v64, 0.0
    %v70 = vand.u32 %v64, 2147483648
    %v71 = vsel %vm69, %v70, %v68
    %v72 = vstv %s55
    %v73 = vmul.f32 %v72, %v71
    %v74 = vstv %s56
    %v75 = vadd.f32 %v73, %v74
    %v76 = vld [vmem:[%s2] sm:$0x1]
    %v77 = vsub.f32 %v75, %v76
    %v78 = vmul.f32 %v77, %v77
    %v79 = vadd.f32 %v78, 0.0
    %s80 = sld [smem:[#allocation2 + $0x1]]
    %s81 = scalar_lea.vmem %s7, %s80
    %v82 = vld [vmem:[%s81] sm:$0x1]
    %v83 = vmul.f32 %v82, %v82
    %v84 = vsel %vm61, %v83, 0.0
    %85 = vadd.xlane.f32.xlu0 %v84
    %v86 = vpop.xlane.xlu0 %85
    %v87 = vrsqrt.pop %v86
    %v88 = vmul.f32 %v86, %v87
    %vm89 = vcmp.eq.f32.partialorder %v86, inf
    %v90 = vsel %vm89, %v86, %v88
    %vm91 = vcmp.eq.f32.partialorder %v86, 0.0
    %v92 = vand.u32 %v86, 2147483648
    %v93 = vsel %vm91, %v92, %v90
    %v94 = vmul.f32 %v72, %v93
    %v95 = vadd.f32 %v94, %v74
    %v96 = vld [vmem:[%s2 + $0x1] sm:$0x1]
    %v97 = vsub.f32 %v95, %v96
    %v98 = vmul.f32 %v97, %v97
    %v99 = vadd.f32 %v79, %v98
    %s100 = sld [smem:[#allocation2 + $0x2]]
    %s101 = scalar_lea.vmem %s7, %s100
    %v102 = vld [vmem:[%s101] sm:$0x1]
    %v103 = vmul.f32 %v102, %v102
    %v104 = vsel %vm61, %v103, 0.0
    %105 = vadd.xlane.f32.xlu0 %v104
    %v106 = vpop.xlane.xlu0 %105
    %v107 = vrsqrt.pop %v106
    %v108 = vmul.f32 %v106, %v107
    %vm109 = vcmp.eq.f32.partialorder %v106, inf
    %v110 = vsel %vm109, %v106, %v108
    %vm111 = vcmp.eq.f32.partialorder %v106, 0.0
    %v112 = vand.u32 %v106, 2147483648
    %v113 = vsel %vm111, %v112, %v110
    %v114 = vmul.f32 %v72, %v113
    %v115 = vadd.f32 %v114, %v74
    %v116 = vld [vmem:[%s2 + $0x2] sm:$0x1]
    %v117 = vsub.f32 %v115, %v116
    %v118 = vmul.f32 %v117, %v117
    %v119 = vadd.f32 %v99, %v118
    %s120 = sld [smem:[#allocation2 + $0x3]]
    %s121 = scalar_lea.vmem %s7, %s120
    %v122 = vld [vmem:[%s121] sm:$0x1]
    %v123 = vmul.f32 %v122, %v122
    %v124 = vsel %vm61, %v123, 0.0
    %125 = vadd.xlane.f32.xlu0 %v124
    %v126 = vpop.xlane.xlu0 %125
    %v127 = vrsqrt.pop %v126
    %v128 = vmul.f32 %v126, %v127
    %vm129 = vcmp.eq.f32.partialorder %v126, inf
    %v130 = vsel %vm129, %v126, %v128
    %vm131 = vcmp.eq.f32.partialorder %v126, 0.0
    %v132 = vand.u32 %v126, 2147483648
    %v133 = vsel %vm131, %v132, %v130
    %v134 = vmul.f32 %v72, %v133
    %v135 = vadd.f32 %v134, %v74
    %v136 = vld [vmem:[%s2 + $0x3] sm:$0x1]
    %v137 = vsub.f32 %v135, %v136
    %v138 = vmul.f32 %v137, %v137
    %v139 = vadd.f32 %v119, %v138
    %s140 = sld [smem:[#allocation2 + $0x4]]
    %s141 = scalar_lea.vmem %s7, %s140
    %v142 = vld [vmem:[%s141] sm:$0x1]
    %v143 = vmul.f32 %v142, %v142
    %v144 = vsel %vm61, %v143, 0.0
    %145 = vadd.xlane.f32.xlu0 %v144
    %v146 = vpop.xlane.xlu0 %145
    %v147 = vrsqrt.pop %v146
    %v148 = vmul.f32 %v146, %v147
    %vm149 = vcmp.eq.f32.partialorder %v146, inf
    %v150 = vsel %vm149, %v146, %v148
    %vm151 = vcmp.eq.f32.partialorder %v146, 0.0
    %v152 = vand.u32 %v146, 2147483648
    %v153 = vsel %vm151, %v152, %v150
    %v154 = vmul.f32 %v72, %v153
    %v155 = vadd.f32 %v154, %v74
    %v156 = vld [vmem:[%s2 + $0x4] sm:$0x1]
    %v157 = vsub.f32 %v155, %v156
    %v158 = vmul.f32 %v157, %v157
    %v159 = vadd.f32 %v139, %v158
    %s160 = sld [smem:[#allocation2 + $0x5]]
    %s161 = scalar_lea.vmem %s7, %s160
    %v162 = vld [vmem:[%s161] sm:$0x1]
    %v163 = vmul.f32 %v162, %v162
    %v164 = vsel %vm61, %v163, 0.0
    %165 = vadd.xlane.f32.xlu0 %v164
    %v166 = vpop.xlane.xlu0 %165
    %v167 = vrsqrt.pop %v166
    %v168 = vmul.f32 %v166, %v167
    %vm169 = vcmp.eq.f32.partialorder %v166, inf
    %v170 = vsel %vm169, %v166, %v168
    %vm171 = vcmp.eq.f32.partialorder %v166, 0.0
    %v172 = vand.u32 %v166, 2147483648
    %v173 = vsel %vm171, %v172, %v170
    %v174 = vmul.f32 %v72, %v173
    %v175 = vadd.f32 %v174, %v74
    %v176 = vld [vmem:[%s2 + $0x5] sm:$0x1]
    %v177 = vsub.f32 %v175, %v176
    %v178 = vmul.f32 %v177, %v177
    %v179 = vadd.f32 %v159, %v178
    %s180 = sld [smem:[#allocation2 + $0x6]]
    %s181 = scalar_lea.vmem %s7, %s180
    %v182 = vld [vmem:[%s181] sm:$0x1]
    %v183 = vmul.f32 %v182, %v182
    %v184 = vsel %vm61, %v183, 0.0
    %185 = vadd.xlane.f32.xlu0 %v184
    %v186 = vpop.xlane.xlu0 %185
    %v187 = vrsqrt.pop %v186
    %v188 = vmul.f32 %v186, %v187
    %vm189 = vcmp.eq.f32.partialorder %v186, inf
    %v190 = vsel %vm189, %v186, %v188
    %vm191 = vcmp.eq.f32.partialorder %v186, 0.0
    %v192 = vand.u32 %v186, 2147483648
    %v193 = vsel %vm191, %v192, %v190
    %v194 = vmul.f32 %v72, %v193
    %v195 = vadd.f32 %v194, %v74
    %v196 = vld [vmem:[%s2 + $0x6] sm:$0x1]
    %v197 = vsub.f32 %v195, %v196
    %v198 = vmul.f32 %v197, %v197
    %v199 = vadd.f32 %v179, %v198
    %s200 = sld [smem:[#allocation2 + $0x7]]
    %s201 = scalar_lea.vmem %s7, %s200
    %v202 = vld [vmem:[%s201] sm:$0x1]
    %v203 = vmul.f32 %v202, %v202
    %v204 = vsel %vm61, %v203, 0.0
    %205 = vadd.xlane.f32.xlu0 %v204
    %v206 = vpop.xlane.xlu0 %205
    %v207 = vrsqrt.pop %v206
    %v208 = vmul.f32 %v206, %v207
    %vm209 = vcmp.eq.f32.partialorder %v206, inf
    %v210 = vsel %vm209, %v206, %v208
    %vm211 = vcmp.eq.f32.partialorder %v206, 0.0
    %v212 = vand.u32 %v206, 2147483648
    %v213 = vsel %vm211, %v212, %v210
    %v214 = vmul.f32 %v72, %v213
    %v215 = vadd.f32 %v214, %v74
    %v216 = vld [vmem:[%s2 + $0x7] sm:$0x1]
    %v217 = vsub.f32 %v215, %v216
    %v218 = vmul.f32 %v217, %v217
    %v219 = vadd.f32 %v199, %v218
    %v220 = vmul.f32 %v219, 0.0125
    %v221 = vld [vmem:[%s3] sm:$0x1]
    %v222 = vld [vmem:[%s4] sm:$0x1]
    %v223 = vld [vmem:[%s5] sm:$0x1]
    %v224 = vld [vmem:[%s6] sm:$0x1]
    %v225 = vsub.f32 %v222, %v224
    %v226 = vmul.f32 %v225, %v225
    %vm227 = vcmask 57344
    %v228 = vsel %vm227, %v226, 0.0
    %229 = vadd.xlane.f32.xlu0 %v228
    %v230 = vpop.xlane.xlu0 %229
    %v231 = vmul.f32 %v230, 0.125
    %v232 = vsub.f32 %v221, %v223
    %v233 = vsub.f32 5.0, %v232
    %v234 = vmax.f32 %v233, 0.0
    %vm235 = vcmp.lt.f32.partialorder %v224, 0.3
    %v236 = vsel %vm235, 0.0, %v224
    %v237 = vmul.f32 %v234, %v236
    %v238 = vsel %vm227, %v237, 0.0
    %239 = vadd.xlane.f32.xlu0 %v238
    %v240 = vpop.xlane.xlu0 %239
    %v241 = vmul.f32 %v240, 0.125
    %v242 = vadd.f32 %v241, %v231
    %v243 = vadd.f32 %v220, %v242
    %vm244 = vcmask 0
    %245 = vst.msk [vmem:[#allocation7] sm:$0x1] %vm244, %v243
    // Predicated region
    $region42: #{tpu_custom_call.1} parent=1 // pred_check
      _
    $region43: #{tpu_custom_call.1} parent=1 // pred_check_branch
      %247 = sbr.rel (0) target = $region45
    $region44: #{tpu_custom_call.1} parent=1 // pred_region
      %s249 = ssub.s32 16, 16
      %250 = vsyncadd [#allocation3], %s249
      %s252 = sshll.u32 [#allocation7], 4
      %s253 = int_to_ptr.vmem [resolvable:$true] %s252
      %255 = dma.vmem_to_hbm [thread:$0]  %s253, 16, %s8, [#allocation3]
    $region45: #{tpu_custom_call.1} parent=1 // pred_fallthru
      _
    // Predicated region
    $region46: #{tpu_custom_call.1} parent=1 // pred_check
      _
    $region47: #{tpu_custom_call.1} parent=1 // pred_check_branch
      %257 = sbr.rel (0) target = $region49
    $region48: #{tpu_custom_call.1} parent=1 // pred_region
      %258 = dma.done [#allocation3], 16
    $region49: #{tpu_custom_call.1} parent=1 // pred_fallthru
      _
    %259 = vsyncpa [#allocation3], 1
    %260 = vsyncpa [#allocation4], 1
    %261 = vsyncpa [#allocation6], 1

</llo_original>
